<compile_context>
chip_gen: v6e
topology: v6e:2x2x1
jax: 0.10.0
libtpu: 0.0.40
codegen_flags: <defaults>
</compile_context>

<pallas_src>
import functools

import jax
import jax.numpy as jnp
from jax.experimental import pallas as pl
from jax.experimental.pallas import tpu as pltpu

# ----------------------------- configuration --------------------------------
D_IN = 32
D_SAE = 64
CONTEXT_LENGTH = 8
N_RANGES = 4
RANGE_SIZE = CONTEXT_LENGTH // N_RANGES      # 2
CHUNK = D_SAE // N_RANGES                    # 16
LN_EPS = 1e-5

LANE_PACK = 4                                # sequences packed along lanes
PACKED_D_IN = LANE_PACK * D_IN               # 128 -> one full lane group
PACKED_D_SAE = LANE_PACK * D_SAE             # 256


# ------------------------------- kernel -------------------------------------
def _positional_sae_kernel(x_ref, slab_ref, out_ref, *, row_block,
                           off_bias, off_gamma, off_beta,
                           off_wenc, off_wdec, off_avg):
    """One row-block of 4-lane-packed sequences: encoder matmul, chunk-wise
    LayerNorm (stats via one [pre; pre^2] @ avg matmul), masked affine + ReLU,
    decoder matmul, single full-width (128-lane) store."""
    x = x_ref[...]                                                  # (R, 128)

    # Static slices of the single resident parameter slab (free views).
    b_dec = slab_ref[0:1, 0:PACKED_D_IN]                            # (1, 128)
    bias = slab_ref[off_bias:off_bias + row_block, :]               # (R, 256)
    gamma = slab_ref[off_gamma:off_gamma + row_block, :]            # (R, 256) mask-folded
    beta = slab_ref[off_beta:off_beta + row_block, :]               # (R, 256) mask-folded
    w_enc = slab_ref[off_wenc:off_wenc + PACKED_D_IN, :]            # (128, 256) block-diag
    w_dec = slab_ref[off_wdec:off_wdec + PACKED_D_SAE, 0:PACKED_D_IN]  # (256, 128) block-diag
    avg = slab_ref[off_avg:off_avg + PACKED_D_SAE, :]               # (256, 256) chunk-avg

    # Encoder pre-activations for every (row, feature); pos_emb/b_dec/b_enc
    # are folded into the per-position `bias` rows.
    pre = jnp.dot(x, w_enc, preferred_element_type=jnp.float32) + bias

    # Chunk-wise LayerNorm stats in ONE MXU round trip.
    stacked = jnp.concatenate([pre, pre * pre], axis=0)             # (2R, 256)
    stats = jnp.dot(stacked, avg, preferred_element_type=jnp.float32)
    mean = stats[0:row_block, :]
    var = jnp.maximum(stats[row_block:2 * row_block, :] - mean * mean, 0.0)

    # gamma/beta already carry the (row-range == feature-chunk) mask, so the
    # ReLU output is exactly the masked `encoded` of the reference module.
    acts = jnp.maximum(
        (pre - mean) * jax.lax.rsqrt(var + LN_EPS) * gamma + beta, 0.0)

    # Decoder + bias: lane-dense (128-wide) single-shot store.
    out_ref[...] = jnp.dot(acts, w_dec,
                           preferred_element_type=jnp.float32) + b_dec


# --------------------------- parameter packing --------------------------------
def _build_param_slab(params, row_block):
    """Pack ALL parameters into one (slab_rows, 256) f32 array (one DMA)."""
    eye_p = jnp.eye(LANE_PACK, dtype=jnp.float32)

    # Per-range encoder blocks concatenated, then block-diagonal lane packing.
    w_enc_full = jnp.transpose(params["W_enc_ranges"], (1, 0, 2)).reshape(D_IN, D_SAE)
    w_enc_packed = jnp.kron(eye_p, w_enc_full)                      # (128, 256)
    w_dec_packed = jnp.kron(eye_p, params["W_dec"])                 # (256, 128)
    w_dec_padded = jnp.pad(w_dec_packed,
                           ((0, 0), (0, PACKED_D_SAE - PACKED_D_IN)))

    # Per-position encoder bias: c[r] = (pos_emb[r] - b_dec) @ W_enc + b_enc.
    c = (params["pos_embeddings"] - params["b_dec"][None, :]) @ w_enc_full \
        + params["b_enc"][None, :]                                  # (4, 64)
    pos_of_row = jnp.arange(CONTEXT_LENGTH) // RANGE_SIZE           # (8,)
    bias8 = jnp.tile(c[pos_of_row], (1, LANE_PACK))                 # (8, 256)
    bias_rows = jnp.tile(bias8, (row_block // CONTEXT_LENGTH, 1))   # (R, 256)

    # Fold the position-range mask into the LayerNorm affine (zero gamma/beta
    # on masked features => relu(0) == 0, matching the reference's masking).
    row_range = (jnp.arange(row_block) % CONTEXT_LENGTH) // RANGE_SIZE
    feat_chunk = (jnp.arange(PACKED_D_SAE) % D_SAE) // CHUNK
    mask = (row_range[:, None] == feat_chunk[None, :]).astype(jnp.float32)
    gamma_rows = mask * jnp.tile(params["ln_weight"], LANE_PACK)[None, :]
    beta_rows = mask * jnp.tile(params["ln_bias"], LANE_PACK)[None, :]

    # Block-averaging matrix for chunk-wise mean/E[x^2] (hoisted out of kernel).
    avg = jnp.kron(jnp.eye(PACKED_D_SAE // CHUNK, dtype=jnp.float32),
                   jnp.full((CHUNK, CHUNK), 1.0 / CHUNK, jnp.float32))

    misc = jnp.zeros((8, PACKED_D_SAE), jnp.float32)
    misc = misc.at[0, :PACKED_D_IN].set(jnp.tile(params["b_dec"], LANE_PACK))

    slab = jnp.concatenate(
        [misc, bias_rows, gamma_rows, beta_rows,
         w_enc_packed, w_dec_padded, avg], axis=0)

    off = {
        "bias": 8,
        "gamma": 8 + row_block,
        "beta": 8 + 2 * row_block,
        "wenc": 8 + 3 * row_block,
        "wdec": 8 + 3 * row_block + PACKED_D_IN,
        "avg": 8 + 3 * row_block + PACKED_D_IN + PACKED_D_SAE,
    }
    return slab, off


# ------------------------------- wrappers -------------------------------------
def positional_sae_forward_batched(xs, params, *, row_block=None):
    """xs: (S, L, d_in) f32 with L == context_length; returns decoded (S, L, d_in)."""
    S, L, d_in = xs.shape
    assert d_in == D_IN and L == CONTEXT_LENGTH

    # Pad sequence count to a multiple of LANE_PACK (extra sequences discarded).
    s_pad = -(-S // LANE_PACK) * LANE_PACK
    if s_pad != S:
        xs = jnp.concatenate(
            [xs, jnp.zeros((s_pad - S, L, D_IN), xs.dtype)], axis=0)

    groups = s_pad // LANE_PACK
    rows = groups * L
    if row_block is None:
        row_block = next(c for c in (512, 256, 128, 64, 32, 16, 8)
                         if c <= rows and rows % c == 0)
    assert row_block % L == 0 and rows % row_block == 0

    # Layout plumbing (wrapper-side XLA): pack 4 sequences along lanes.
    xp = (xs.reshape(groups, LANE_PACK, L, D_IN)
            .transpose(0, 2, 1, 3)
            .reshape(rows, PACKED_D_IN))

    slab, off = _build_param_slab(params, row_block)
    slab_rows = slab.shape[0]

    kernel = functools.partial(
        _positional_sae_kernel, row_block=row_block,
        off_bias=off["bias"], off_gamma=off["gamma"], off_beta=off["beta"],
        off_wenc=off["wenc"], off_wdec=off["wdec"], off_avg=off["avg"])

    out = pl.pallas_call(
        kernel,
        out_shape=jax.ShapeDtypeStruct((rows, PACKED_D_IN), jnp.float32),
        grid=(rows // row_block,),
        in_specs=[
            pl.BlockSpec((row_block, PACKED_D_IN), lambda i: (i, 0)),   # activations
            pl.BlockSpec((slab_rows, PACKED_D_SAE), lambda i: (0, 0)),  # resident params
        ],
        out_specs=pl.BlockSpec((row_block, PACKED_D_IN), lambda i: (i, 0)),
        compiler_params=pltpu.CompilerParams(
            dimension_semantics=("parallel",)),
    )(xp, slab)

    decoded = (out.reshape(groups, L, LANE_PACK, D_IN)
                  .transpose(0, 2, 1, 3)
                  .reshape(s_pad, L, D_IN))
    return decoded[:S]


def positional_sae_forward(x, params):
    """Module-equivalent call: x is (B, d_in), B <= context_length, row == position."""
    B, d_in = x.shape
    assert d_in == D_IN and B <= CONTEXT_LENGTH
    x_seq = jnp.zeros((CONTEXT_LENGTH, D_IN), x.dtype).at[:B].set(x)
    return positional_sae_forward_batched(x_seq[None], params)[0, :B]


# --------------------------- parameter init ----------------------------------
def _orthogonal(key, rows, cols):
    """Deterministic orthogonal init (QR of a Gaussian), torch-style."""
    if rows >= cols:
        a = jax.random.normal(key, (rows, cols), dtype=jnp.float32)
        q, r = jnp.linalg.qr(a)
        return q * jnp.sign(jnp.diagonal(r))[None, :]
    a = jax.random.normal(key, (cols, rows), dtype=jnp.float32)
    q, r = jnp.linalg.qr(a)
    return (q * jnp.sign(jnp.diagonal(r))[None, :]).T


def init_params(key):
    keys = jax.random.split(key, N_RANGES + 6)
    w_enc_ranges = jnp.stack(
        [_orthogonal(keys[i], D_IN, CHUNK) for i in range(N_RANGES)], axis=0)
    pos_embeddings = 0.02 * jax.random.normal(
        keys[N_RANGES], (N_RANGES, D_IN), dtype=jnp.float32)
    w_dec = _orthogonal(keys[N_RANGES + 1], D_SAE, D_IN)
    # torch inits these to zeros/ones; small random values here exercise every
    # parameter path of the kernel (forward semantics are unchanged).
    b_enc = 0.02 * jax.random.normal(keys[N_RANGES + 2], (D_SAE,), jnp.float32)
    b_dec = 0.02 * jax.random.normal(keys[N_RANGES + 3], (D_IN,), jnp.float32)
    ln_weight = 1.0 + 0.02 * jax.random.normal(keys[N_RANGES + 4], (D_SAE,), jnp.float32)
    ln_bias = 0.02 * jax.random.normal(keys[N_RANGES + 5], (D_SAE,), jnp.float32)
    return {
        "W_enc_ranges": w_enc_ranges,                 # (R, d_in, d_sae//R)
        "pos_embeddings": pos_embeddings,             # (R, d_in)
        "W_dec": w_dec,                               # (d_sae, d_in)
        "b_enc": b_enc,
        "b_dec": b_dec,
        "ln_weight": ln_weight,
        "ln_bias": ln_bias,
    }


# ------------------------- pure-JAX reference --------------------------------
def reference_forward(x, params):
    """Reference for a single sequence x: (B, d_in), row == position."""
    B = x.shape[0]
    pos = jnp.arange(min(B, CONTEXT_LENGTH))
    range_idx = pos // RANGE_SIZE
    encoded = jnp.zeros((B, D_SAE), jnp.float32)
    for r in range(N_RANGES):
        mask = range_idx == r
        xr = x + params["pos_embeddings"][r]
        pre = (xr - params["b_dec"]) @ params["W_enc_ranges"][r] \
            + params["b_enc"][r * CHUNK:(r + 1) * CHUNK]
        mean = pre.mean(-1, keepdims=True)
        var = ((pre - mean) ** 2).mean(-1, keepdims=True)
        normed = (pre - mean) * jax.lax.rsqrt(var + LN_EPS) \
            * params["ln_weight"][r * CHUNK:(r + 1) * CHUNK] \
            + params["ln_bias"][r * CHUNK:(r + 1) * CHUNK]
        acts = jnp.maximum(normed, 0.0)
        acts = jnp.where(mask[:, None], acts, 0.0)
        encoded = encoded.at[:, r * CHUNK:(r + 1) * CHUNK].set(acts)
    return encoded @ params["W_dec"] + params["b_dec"]


# --------------------------------- main --------------------------------------
if __name__ == "__main__":
    key = jax.random.PRNGKey(0)
    pkey, xkey = jax.random.split(key)
    params = init_params(pkey)

    # Batched path: 16 sequences of length 8; 4 packed per lane group gives
    # 32 packed rows; row_block=16 gives a 2-step "parallel" grid.
    n_seq = 16
    xs = jax.random.normal(xkey, (n_seq, CONTEXT_LENGTH, D_IN), dtype=jnp.float32)

    out = positional_sae_forward_batched(xs, params, row_block=16)
    out = jax.block_until_ready(out)
    assert out.shape == xs.shape

    ref = jax.vmap(lambda s: reference_forward(s, params))(xs)
    assert jnp.allclose(out, ref, atol=1e-2, rtol=1e-2), (
        float(jnp.max(jnp.abs(out - ref))))

    # Module-style single call (batch axis == position axis, B <= context).
    x1 = xs[0, :6]
    out1 = jax.block_until_ready(positional_sae_forward(x1, params))
    ref1 = reference_forward(x1, params)
    assert out1.shape == x1.shape
    assert jnp.allclose(out1, ref1, atol=1e-2, rtol=1e-2), (
        float(jnp.max(jnp.abs(out1 - ref1))))

    print("KERNEL_OK")
</pallas_src>

<mosaic_0001>
module attributes {stable_mosaic.version = 11 : i64} {
  func.func @_positional_sae_kernel(%arg0: i32, %arg1: memref<16x128xf32, #tpu.memory_space<vmem>>, %arg2: memref<696x256xf32, #tpu.memory_space<vmem>>, %arg3: memref<16x128xf32, #tpu.memory_space<vmem>>) attributes {dimension_semantics = [#tpu.dimension_semantics<parallel>], iteration_bounds = array<i64: 2>, scalar_prefetch = 0 : i64, scratch_operands = 0 : i64, tpu.core_type = #tpu.core_type<tc>, window_params = [{transform_indices = @transform_0, window_bounds = array<i64: 16, 128>}, {pipeline_mode = #tpu.pipeline_mode<synchronous>, transform_indices = @transform_1, window_bounds = array<i64: 696, 256>}, {transform_indices = @transform_2, window_bounds = array<i64: 16, 128>}]} {
    %c0 = arith.constant 0 : index
    %c0_0 = arith.constant 0 : index
    %0 = vector.load %arg1[%c0, %c0_0] : memref<16x128xf32, #tpu.memory_space<vmem>>, vector<16x128xf32>
    %c0_1 = arith.constant 0 : index
    %c0_2 = arith.constant 0 : index
    %1 = vector.load %arg2[%c0_1, %c0_2] : memref<696x256xf32, #tpu.memory_space<vmem>>, vector<1x128xf32>
    %c8 = arith.constant 8 : index
    %c0_3 = arith.constant 0 : index
    %2 = vector.load %arg2[%c8, %c0_3] : memref<696x256xf32, #tpu.memory_space<vmem>>, vector<16x256xf32>
    %c24 = arith.constant 24 : index
    %c0_4 = arith.constant 0 : index
    %3 = vector.load %arg2[%c24, %c0_4] : memref<696x256xf32, #tpu.memory_space<vmem>>, vector<16x256xf32>
    %c40 = arith.constant 40 : index
    %c0_5 = arith.constant 0 : index
    %4 = vector.load %arg2[%c40, %c0_5] : memref<696x256xf32, #tpu.memory_space<vmem>>, vector<16x256xf32>
    %c56 = arith.constant 56 : index
    %c0_6 = arith.constant 0 : index
    %5 = vector.load %arg2[%c56, %c0_6] : memref<696x256xf32, #tpu.memory_space<vmem>>, vector<128x256xf32>
    %c184 = arith.constant 184 : index
    %c0_7 = arith.constant 0 : index
    %6 = vector.load %arg2[%c184, %c0_7] : memref<696x256xf32, #tpu.memory_space<vmem>>, vector<256x128xf32>
    %c440 = arith.constant 440 : index
    %c0_8 = arith.constant 0 : index
    %7 = vector.load %arg2[%c440, %c0_8] : memref<696x256xf32, #tpu.memory_space<vmem>>, vector<256x256xf32>
    %cst = arith.constant dense<0.000000e+00> : vector<16x256xf32>
    %8 = tpu.matmul %0, %5, %cst {dimension_numbers = #tpu.dot_dimension_numbers<[1], [0], [0], [1], [0, 0, 1, 1], [], []>} : vector<16x128xf32>, vector<128x256xf32>, vector<16x256xf32> -> vector<16x256xf32>
    %9 = arith.addf %8, %2 : vector<16x256xf32>
    %10 = arith.mulf %9, %9 : vector<16x256xf32>
    %11 = tpu.concatenate %9, %10 in 0 : vector<16x256xf32>, vector<16x256xf32> -> vector<32x256xf32>
    %cst_9 = arith.constant dense<0.000000e+00> : vector<32x256xf32>
    %12 = tpu.matmul %11, %7, %cst_9 {dimension_numbers = #tpu.dot_dimension_numbers<[1], [0], [0], [1], [0, 0, 1, 1], [], []>} : vector<32x256xf32>, vector<256x256xf32>, vector<32x256xf32> -> vector<32x256xf32>
    %13 = vector.extract_strided_slice %12 {offsets = [0, 0], sizes = [16, 256], strides = [1, 1]} : vector<32x256xf32> to vector<16x256xf32>
    %14 = vector.extract_strided_slice %12 {offsets = [16, 0], sizes = [16, 256], strides = [1, 1]} : vector<32x256xf32> to vector<16x256xf32>
    %15 = arith.mulf %13, %13 : vector<16x256xf32>
    %16 = arith.subf %14, %15 : vector<16x256xf32>
    %cst_10 = arith.constant 0.000000e+00 : f32
    %17 = vector.broadcast %cst_10 : f32 to vector<16x256xf32>
    %18 = arith.maximumf %16, %17 : vector<16x256xf32>
    %19 = arith.subf %9, %13 : vector<16x256xf32>
    %cst_11 = arith.constant 9.99999974E-6 : f32
    %20 = vector.broadcast %cst_11 : f32 to vector<16x256xf32>
    %21 = arith.addf %18, %20 : vector<16x256xf32>
    %22 = math.rsqrt %21 : vector<16x256xf32>
    %23 = arith.mulf %19, %22 : vector<16x256xf32>
    %24 = arith.mulf %23, %3 : vector<16x256xf32>
    %25 = arith.addf %24, %4 : vector<16x256xf32>
    %cst_12 = arith.constant 0.000000e+00 : f32
    %26 = vector.broadcast %cst_12 : f32 to vector<16x256xf32>
    %27 = arith.maximumf %25, %26 : vector<16x256xf32>
    %cst_13 = arith.constant dense<0.000000e+00> : vector<16x128xf32>
    %28 = tpu.matmul %27, %6, %cst_13 {dimension_numbers = #tpu.dot_dimension_numbers<[1], [0], [0], [1], [0, 0, 1, 1], [], []>} : vector<16x256xf32>, vector<256x128xf32>, vector<16x128xf32> -> vector<16x128xf32>
    %29 = vector.broadcast %1 : vector<1x128xf32> to vector<16x128xf32>
    %30 = arith.addf %28, %29 : vector<16x128xf32>
    %c0_14 = arith.constant 0 : index
    %c0_15 = arith.constant 0 : index
    %31 = vector.load %arg3[%c0_14, %c0_15] : memref<16x128xf32, #tpu.memory_space<vmem>>, vector<16x128xf32>
    tpu.vector_store %arg3[%c0_14, %c0_15], %30 {strides = array<i32>} : memref<16x128xf32, #tpu.memory_space<vmem>>, vector<16x128xf32>,
    return
  }
  func.func @transform_0(%arg0: i32) -> (i32, i32) {
    %c0_i32 = arith.constant 0 : i32
    %c0_i32_0 = arith.constant 0 : i32
    return %arg0, %c0_i32 : i32, i32
  }
  func.func @transform_1(%arg0: i32) -> (i32, i32) {
    %c0_i32 = arith.constant 0 : i32
    %c0_i32_0 = arith.constant 0 : i32
    %c0_i32_1 = arith.constant 0 : i32
    return %c0_i32, %c0_i32_0 : i32, i32
  }
  func.func @transform_2(%arg0: i32) -> (i32, i32) {
    %c0_i32 = arith.constant 0 : i32
    %c0_i32_0 = arith.constant 0 : i32
    return %arg0, %c0_i32 : i32, i32
  }
}

</mosaic_0001>

<llo_original>
// kernel: tpu_custom_call.1
$region0: #{tpu_custom_call.1}
  #allocation0 [shape = 'u32[]', space=smem, size = 0x4, offset = 0x4, fixed_abs, tag = 'smem constant byte address 0x4 - core index']
  #allocation1 [shape = 'u32[144,128]{1,0:T(1,128)}', space=vmem, size = 0x12000, scoped, tag = 'internal scratch']
  %s0 = inlined_call_operand.hbm [shape: f32[32,128], index: 0, kind: input, shape index: {}]
  %s1 = inlined_call_operand.hbm [shape: f32[696,256], index: 1, kind: input, shape index: {}]
  %s2 = inlined_call_operand.hbm [shape: f32[32,128], index: 2, kind: output, shape index: {}]
  %s3 = sld [smem:[#allocation0]]
  $region49: #{tpu_custom_call.1} parent=0
    _
  %s5 = ssub.s32 1, %s3
  %s6 = scalar_select 0, %s5, %s3
  $region1: #{tpu_custom_call.1} parent=0
    #allocation2 [shape = 'u8[16384]{0}', space=vmem, size = 0x4000, scoped, tag = 'input window, operand 0']
    #allocation3 [shape = 's32[2]{0}', space=sflag, size = 0x8, scoped, tag = 'scoped memory for tpu_custom_call.1']
    #allocation4 [shape = 's32[2]{0}', space=sflag, size = 0x8, scoped, tag = 'scoped memory for tpu_custom_call.1']
    #allocation5 [shape = 'u8[712704]{0}', space=vmem, size = 0xae000, scoped, tag = 'input window, operand 1, single buffered']
    #allocation6 [shape = 's32[1]{0}', space=sflag, size = 0x4, scoped, tag = 'scoped memory for tpu_custom_call.1']
    #allocation7 [shape = 'u8[16384]{0}', space=vmem, size = 0x4000, scoped, tag = 'output window, operand 0']
    %7 = vsyncpa [#allocation3], 0
    %s8 = scalar_lea.sflag [#allocation3], 1
    %9 = vsyncpa %s8, 0
    %10 = vsyncpa [#allocation6], 0
    %11 = vsyncpa [#allocation4], 0
    %s12 = scalar_lea.sflag [#allocation4], 1
    %13 = vsyncpa %s12, 0
    loop: start=0, step=1, limit=4
    $region2: #{tpu_custom_call.1} parent=1 // loop_pre_header
      _
    $region3: #{tpu_custom_call.1} parent=1 // loop_header
      %s15 = sphi 0, %s19
      %p16 = scmp.ge.s32.totalorder %s15, 4
      %s25 = sphi 0, %s27
      %s28 = sphi 0, %s25
      %s29 = sphi 0, %s28
      %s45 = sphi 0, %s29
      %s49 = sphi 0, %s49
      %s51 = sphi 0, %s49
      %s52 = sphi 0, %s51
      %s66 = sphi 0, %s52
      %s72 = sphi 0, %s74
      %s75 = sphi 0, %s72
      %s76 = sphi 0, %s75
      %s92 = sphi 0, %s76
    $region4: #{tpu_custom_call.1} parent=1 // loop_header_branch
      %18 = sbr.rel (%p16) target = $region8
    $region5: #{tpu_custom_call.1} parent=1 // loop_body
      %s20 = ssub.s32 %s15, 1
      %s21 = ssub.s32 %s15, 2
      %s22 = sadd.s32 %s15, 1
      %s23 = ssub.s32 %s15, %s22
      %p24 = scmp.eq.s32.totalorder %s23, 0
      %s26 = sadd.s32 %s25, 1
      %s27 = scalar_select %p24, %s25, %s26
      %p30 = pneg %p24
      %p31 = scmp.eq.s32.totalorder %s15, 1
      %p32 = por %p30, %p31
      %p33 = scmp.ne.s32.totalorder %s25, %s28
      %p34 = scmp.eq.s32.totalorder %s15, 0
      %p35 = por %p33, %p34
      %p36 = scmp.ne.s32.totalorder %s25, %s28
      %p37 = scmp.eq.s32.totalorder %s20, 1
      %p38 = por %p36, %p37
      %p39 = scmp.ne.s32.totalorder %s28, %s29
      %p40 = scmp.eq.s32.totalorder %s20, 0
      %p41 = por %p39, %p40
      %p42 = scmp.ne.s32.totalorder %s28, %s29
      %p43 = scmp.eq.s32.totalorder %s21, 1
      %p44 = por %p42, %p43
      %p46 = scmp.ne.s32.totalorder %s29, %s45
      %p47 = scmp.eq.s32.totalorder %s21, 0
      %p48 = por %p46, %p47
      %s50 = sadd.s32 %s49, 1
      %p53 = scmp.eq.s32.totalorder %s15, 1
      %p54 = scmp.ne.s32.totalorder %s49, %s51
      %p55 = scmp.eq.s32.totalorder %s15, 0
      %p56 = por %p54, %p55
      %p57 = scmp.ne.s32.totalorder %s49, %s51
      %p58 = scmp.eq.s32.totalorder %s20, 1
      %p59 = por %p57, %p58
      %p60 = scmp.ne.s32.totalorder %s51, %s52
      %p61 = scmp.eq.s32.totalorder %s20, 0
      %p62 = por %p60, %p61
      %p63 = scmp.ne.s32.totalorder %s51, %s52
      %p64 = scmp.eq.s32.totalorder %s21, 1
      %p65 = por %p63, %p64
      %p67 = scmp.ne.s32.totalorder %s52, %s66
      %p68 = scmp.eq.s32.totalorder %s21, 0
      %p69 = por %p67, %p68
      %s70 = ssub.s32 %s15, %s22
      %p71 = scmp.eq.s32.totalorder %s70, 0
      %s73 = sadd.s32 %s72, 1
      %s74 = scalar_select %p71, %s72, %s73
      %p77 = pneg %p71
      %p78 = scmp.eq.s32.totalorder %s15, 1
      %p79 = por %p77, %p78
      %p80 = scmp.ne.s32.totalorder %s72, %s75
      %p81 = scmp.eq.s32.totalorder %s15, 0
      %p82 = por %p80, %p81
      %p83 = scmp.ne.s32.totalorder %s72, %s75
      %p84 = scmp.eq.s32.totalorder %s20, 1
      %p85 = por %p83, %p84
      %p86 = scmp.ne.s32.totalorder %s75, %s76
      %p87 = scmp.eq.s32.totalorder %s20, 0
      %p88 = por %p86, %p87
      %p89 = scmp.ne.s32.totalorder %s75, %s76
      %p90 = scmp.eq.s32.totalorder %s21, 1
      %p91 = por %p89, %p90
      %p93 = scmp.ne.s32.totalorder %s76, %s92
      %p94 = scmp.eq.s32.totalorder %s21, 0
      %p95 = por %p93, %p94
      %p96 = scmp.le.s32.totalorder 1, %s15
      %p97 = scmp.lt.s32.totalorder %s15, 3
      %p98 = pnand %p96, %p97
      %p99 = pneg %p98
      // Predicated region
      $region9: #{tpu_custom_call.1} parent=5 // pred_check
        _
      $region10: #{tpu_custom_call.1} parent=5 // pred_check_branch
        %101 = sbr.rel (%p98) target = $region12
      $region11: #{tpu_custom_call.1} parent=5 // pred_region
        %s102 = ssub.s32 %s15, 1
        // Predicated region
        $region13: #{tpu_custom_call.1} parent=11 // pred_check
          %p103 = pneg %p62
        $region14: #{tpu_custom_call.1} parent=11 // pred_check_branch
          %105 = sbr.rel (%p103) target = $region16
        $region15: #{tpu_custom_call.1} parent=11 // pred_region
          %s107 = ssub.s32 22272, 22272
          %108 = vsyncadd [#allocation6], %s107
          %s109 = sshll.u32 [#allocation5], 4
          %s110 = int_to_ptr.vmem [resolvable:$true] %s109
          %115 = dma.hbm_to_vmem [thread:$0]  %s1, 22272, %s110, [#allocation6], 256, 256, 16
        $region16: #{tpu_custom_call.1} parent=11 // pred_fallthru
          _
      $region12: #{tpu_custom_call.1} parent=5 // pred_fallthru
        _
      %p116 = scmp.lt.s32.totalorder %s15, 2
      // Predicated region
      $region17: #{tpu_custom_call.1} parent=5 // pred_check
        %p117 = pneg %p116
      $region18: #{tpu_custom_call.1} parent=5 // pred_check_branch
        %119 = sbr.rel (%p117) target = $region20
      $region19: #{tpu_custom_call.1} parent=5 // pred_region
        // Predicated region
        $region21: #{tpu_custom_call.1} parent=19 // pred_check
          %p120 = pneg %p35
        $region22: #{tpu_custom_call.1} parent=19 // pred_check_branch
          %122 = sbr.rel (%p120) target = $region24
        $region23: #{tpu_custom_call.1} parent=19 // pred_region
          %s123 = sand.u32 %s25, 1
          %s124 = scalar_lea.sflag [#allocation3], %s123
          %s125 = sand.u32 %s25, 1
          %s126 = smul.addr %s125, 16
          %s127 = scalar_lea.vmem [#allocation2], %s126
          %s128 = smul.u32 2, %s15
          %s130 = ssub.s32 256, 256
          %131 = vsyncadd %s124, %s130
          %s132 = smul.addr %s128, 128
          %s133 = scalar_lea.hbm %s0, %s132
          %s134 = sshll.u32 %s127, 4
          %s135 = int_to_ptr.vmem [resolvable:$true] %s134
          %140 = dma.hbm_to_vmem [thread:$0]  %s133, 256, %s135, %s124, 128, 128, 8
        $region24: #{tpu_custom_call.1} parent=19 // pred_fallthru
          _
      $region20: #{tpu_custom_call.1} parent=5 // pred_fallthru
        _
      %p141 = scmp.le.s32.totalorder 1, %s15
      %p142 = scmp.lt.s32.totalorder %s15, 3
      %p143 = pnand %p141, %p142
      %p144 = pneg %p143
      // Predicated region
      $region25: #{tpu_custom_call.1} parent=5 // pred_check
        _
      $region26: #{tpu_custom_call.1} parent=5 // pred_check_branch
        %146 = sbr.rel (%p143) target = $region28
      $region27: #{tpu_custom_call.1} parent=5 // pred_region
        %s147 = ssub.s32 %s15, 1
        %s148 = sand.u32 %s28, 1
        %s149 = scalar_lea.sflag [#allocation3], %s148
        %s150 = sand.u32 %s28, 1
        %s151 = smul.addr %s150, 16
        %s152 = scalar_lea.vmem [#allocation2], %s151
        // Predicated region
        $region29: #{tpu_custom_call.1} parent=27 // pred_check
          %p153 = pneg %p41
        $region30: #{tpu_custom_call.1} parent=27 // pred_check_branch
          %155 = sbr.rel (%p153) target = $region32
        $region31: #{tpu_custom_call.1} parent=27 // pred_region
          %156 = dma.done %s149, 256
        $region32: #{tpu_custom_call.1} parent=27 // pred_fallthru
          _
        // Predicated region
        $region33: #{tpu_custom_call.1} parent=27 // pred_check
          %p157 = pneg %p62
        $region34: #{tpu_custom_call.1} parent=27 // pred_check_branch
          %159 = sbr.rel (%p157) target = $region36
        $region35: #{tpu_custom_call.1} parent=27 // pred_region
          %160 = dma.done [#allocation6], 22272
        $region36: #{tpu_custom_call.1} parent=27 // pred_fallthru
          _
        %s161 = sand.u32 %s28, 1
        %s162 = scalar_lea.sflag [#allocation3], %s161
        %s163 = sand.u32 %s28, 1
        %s164 = smul.addr %s163, 16
        %s165 = scalar_lea.vmem [#allocation2], %s164
        %p166 = pneg %p41
        %p167 = pneg %p38
        %p168 = pneg %p62
        %p169 = pneg %p59
        %p170 = pneg %p88
        %p171 = pneg %p85
        %s172 = sand.u32 %s75, 1
        %s173 = scalar_lea.sflag [#allocation4], %s172
        %s174 = sand.u32 %s75, 1
        %s175 = smul.addr %s174, 16
        %s176 = scalar_lea.vmem [#allocation7], %s175
        %s177 = smul.u32 2, %s20
        %s178 = smul.u32 2, %s20
        %v179 = vld [vmem:[%s152] sm:$0xff]
        %v180 = vld [vmem:[%s152 + $0x8] sm:$0xff]
        %v181 = vld [vmem:[#allocation5] ss:$0 sm:$0xff]
        %v182 = vld [vmem:[#allocation5 + $0x10] sm:$0xff]
        %v183 = vld [vmem:[#allocation5 + $0x18] sm:$0xff]
        %v184 = vld [vmem:[#allocation5 + $0x20] sm:$0xff]
        %v185 = vld [vmem:[#allocation5 + $0x28] sm:$0xff]
        %v186 = vld [vmem:[#allocation5 + $0x30] sm:$0xff]
        %v187 = vld [vmem:[#allocation5 + $0x38] sm:$0xff]
        %v188 = vld [vmem:[#allocation5 + $0x40] sm:$0xff]
        %v189 = vld [vmem:[#allocation5 + $0x48] sm:$0xff]
        %v190 = vld [vmem:[#allocation5 + $0x50] sm:$0xff]
        %v191 = vld [vmem:[#allocation5 + $0x58] sm:$0xff]
        %v192 = vld [vmem:[#allocation5 + $0x60] sm:$0xff]
        %v193 = vld [vmem:[#allocation5 + $0x68] sm:$0xff]
        %v194 = vld [vmem:[#allocation5 + $0x70] sm:$0xff]
        %v195 = vld [vmem:[#allocation5 + $0x78] sm:$0xff]
        %v196 = vld [vmem:[#allocation5 + $0x80] sm:$0xff]
        %v197 = vld [vmem:[#allocation5 + $0x88] sm:$0xff]
        %v198 = vld [vmem:[#allocation5 + $0x90] sm:$0xff]
        %v199 = vld [vmem:[#allocation5 + $0x98] sm:$0xff]
        %v200 = vld [vmem:[#allocation5 + $0xa0] sm:$0xff]
        %v201 = vld [vmem:[#allocation5 + $0xa8] sm:$0xff]
        %v202 = vld [vmem:[#allocation5 + $0xb0] sm:$0xff]
        %v203 = vld [vmem:[#allocation5 + $0xb8] sm:$0xff]
        %v204 = vld [vmem:[#allocation5 + $0xc0] sm:$0xff]
        %v205 = vld [vmem:[#allocation5 + $0xc8] sm:$0xff]
        %v206 = vld [vmem:[#allocation5 + $0xd0] sm:$0xff]
        %v207 = vld [vmem:[#allocation5 + $0xd8] sm:$0xff]
        %v208 = vld [vmem:[#allocation5 + $0xe0] sm:$0xff]
        %v209 = vld [vmem:[#allocation5 + $0xe8] sm:$0xff]
        %v210 = vld [vmem:[#allocation5 + $0xf0] sm:$0xff]
        %v211 = vld [vmem:[#allocation5 + $0xf8] sm:$0xff]
        %v212 = vld [vmem:[#allocation5 + $0x100] sm:$0xff]
        %v213 = vld [vmem:[#allocation5 + $0x108] sm:$0xff]
        %v214 = vld [vmem:[#allocation5 + $0x110] sm:$0xff]
        %v215 = vld [vmem:[#allocation5 + $0x118] sm:$0xff]
        %v216 = vld [vmem:[#allocation5 + $0x120] sm:$0xff]
        %v217 = vld [vmem:[#allocation5 + $0x128] sm:$0xff]
        %v218 = vld [vmem:[#allocation5 + $0x130] sm:$0xff]
        %v219 = vld [vmem:[#allocation5 + $0x138] sm:$0xff]
        %v220 = vld [vmem:[#allocation5 + $0x140] sm:$0xff]
        %v221 = vld [vmem:[#allocation5 + $0x148] sm:$0xff]
        %v222 = vld [vmem:[#allocation5 + $0x150] sm:$0xff]
        %v223 = vld [vmem:[#allocation5 + $0x158] sm:$0xff]
        %v224 = vld [vmem:[#allocation5 + $0x160] sm:$0xff]
        %v225 = vld [vmem:[#allocation5 + $0x168] sm:$0xff]
        %v226 = vld [vmem:[#allocation5 + $0x170] sm:$0xff]
        %v227 = vld [vmem:[#allocation5 + $0x180] sm:$0xff]
        %v228 = vld [vmem:[#allocation5 + $0x190] sm:$0xff]
        %v229 = vld [vmem:[#allocation5 + $0x1a0] sm:$0xff]
        %v230 = vld [vmem:[#allocation5 + $0x1b0] sm:$0xff]
        %v231 = vld [vmem:[#allocation5 + $0x1c0] sm:$0xff]
        %v232 = vld [vmem:[#allocation5 + $0x1d0] sm:$0xff]
        %v233 = vld [vmem:[#allocation5 + $0x1e0] sm:$0xff]
        %v234 = vld [vmem:[#allocation5 + $0x1f0] sm:$0xff]
        %v235 = vld [vmem:[#allocation5 + $0x200] sm:$0xff]
        %v236 = vld [vmem:[#allocation5 + $0x210] sm:$0xff]
        %v237 = vld [vmem:[#allocation5 + $0x220] sm:$0xff]
        %v238 = vld [vmem:[#allocation5 + $0x230] sm:$0xff]
        %v239 = vld [vmem:[#allocation5 + $0x240] sm:$0xff]
        %v240 = vld [vmem:[#allocation5 + $0x250] sm:$0xff]
        %v241 = vld [vmem:[#allocation5 + $0x260] sm:$0xff]
        %v242 = vld [vmem:[#allocation5 + $0x270] sm:$0xff]
        %v243 = vld [vmem:[#allocation5 + $0x280] sm:$0xff]
        %v244 = vld [vmem:[#allocation5 + $0x290] sm:$0xff]
        %v245 = vld [vmem:[#allocation5 + $0x2a0] sm:$0xff]
        %v246 = vld [vmem:[#allocation5 + $0x2b0] sm:$0xff]
        %v247 = vld [vmem:[#allocation5 + $0x2c0] sm:$0xff]
        %v248 = vld [vmem:[#allocation5 + $0x2d0] sm:$0xff]
        %v249 = vld [vmem:[#allocation5 + $0x2e0] sm:$0xff]
        %v250 = vld [vmem:[#allocation5 + $0x2f0] sm:$0xff]
        %v251 = vld [vmem:[#allocation5 + $0x300] sm:$0xff]
        %v252 = vld [vmem:[#allocation5 + $0x310] sm:$0xff]
        %v253 = vld [vmem:[#allocation5 + $0x320] sm:$0xff]
        %v254 = vld [vmem:[#allocation5 + $0x330] sm:$0xff]
        %v255 = vld [vmem:[#allocation5 + $0x340] sm:$0xff]
        %v256 = vld [vmem:[#allocation5 + $0x350] sm:$0xff]
        %v257 = vld [vmem:[#allocation5 + $0x360] sm:$0xff]
        %v258 = vld [vmem:[#allocation5 + $0x370] sm:$0xff]
        %v259 = vld [vmem:[#allocation5 + $0x378] sm:$0xff]
        %v260 = vld [vmem:[#allocation5 + $0x380] sm:$0xff]
        %v261 = vld [vmem:[#allocation5 + $0x388] sm:$0xff]
        %v262 = vld [vmem:[#allocation5 + $0x390] sm:$0xff]
        %v263 = vld [vmem:[#allocation5 + $0x398] sm:$0xff]
        %v264 = vld [vmem:[#allocation5 + $0x3a0] sm:$0xff]
        %v265 = vld [vmem:[#allocation5 + $0x3a8] sm:$0xff]
        %v266 = vld [vmem:[#allocation5 + $0x3b0] sm:$0xff]
        %v267 = vld [vmem:[#allocation5 + $0x3b8] sm:$0xff]
        %v268 = vld [vmem:[#allocation5 + $0x3c0] sm:$0xff]
        %v269 = vld [vmem:[#allocation5 + $0x3c8] sm:$0xff]
        %v270 = vld [vmem:[#allocation5 + $0x3d0] sm:$0xff]
        %v271 = vld [vmem:[#allocation5 + $0x3d8] sm:$0xff]
        %v272 = vld [vmem:[#allocation5 + $0x3e0] sm:$0xff]
        %v273 = vld [vmem:[#allocation5 + $0x3e8] sm:$0xff]
        %v274 = vld [vmem:[#allocation5 + $0x3f0] sm:$0xff]
        %v275 = vld [vmem:[#allocation5 + $0x3f8] sm:$0xff]
        %v276 = vld [vmem:[#allocation5 + $0x400] sm:$0xff]
        %v277 = vld [vmem:[#allocation5 + $0x408] sm:$0xff]
        %v278 = vld [vmem:[#allocation5 + $0x410] sm:$0xff]
        %v279 = vld [vmem:[#allocation5 + $0x418] sm:$0xff]
        %v280 = vld [vmem:[#allocation5 + $0x420] sm:$0xff]
        %v281 = vld [vmem:[#allocation5 + $0x428] sm:$0xff]
        %v282 = vld [vmem:[#allocation5 + $0x430] sm:$0xff]
        %v283 = vld [vmem:[#allocation5 + $0x438] sm:$0xff]
        %v284 = vld [vmem:[#allocation5 + $0x440] sm:$0xff]
        %v285 = vld [vmem:[#allocation5 + $0x448] sm:$0xff]
        %v286 = vld [vmem:[#allocation5 + $0x450] sm:$0xff]
        %v287 = vld [vmem:[#allocation5 + $0x458] sm:$0xff]
        %v288 = vld [vmem:[#allocation5 + $0x460] sm:$0xff]
        %v289 = vld [vmem:[#allocation5 + $0x468] sm:$0xff]
        %v290 = vld [vmem:[#allocation5 + $0x470] sm:$0xff]
        %v291 = vld [vmem:[#allocation5 + $0x478] sm:$0xff]
        %v292 = vld [vmem:[#allocation5 + $0x480] sm:$0xff]
        %v293 = vld [vmem:[#allocation5 + $0x488] sm:$0xff]
        %v294 = vld [vmem:[#allocation5 + $0x490] sm:$0xff]
        %v295 = vld [vmem:[#allocation5 + $0x498] sm:$0xff]
        %v296 = vld [vmem:[#allocation5 + $0x4a0] sm:$0xff]
        %v297 = vld [vmem:[#allocation5 + $0x4a8] sm:$0xff]
        %v298 = vld [vmem:[#allocation5 + $0x4b0] sm:$0xff]
        %v299 = vld [vmem:[#allocation5 + $0x4b8] sm:$0xff]
        %v300 = vld [vmem:[#allocation5 + $0x4c0] sm:$0xff]
        %v301 = vld [vmem:[#allocation5 + $0x4c8] sm:$0xff]
        %v302 = vld [vmem:[#allocation5 + $0x4d0] sm:$0xff]
        %v303 = vld [vmem:[#allocation5 + $0x4d8] sm:$0xff]
        %v304 = vld [vmem:[#allocation5 + $0x4e0] sm:$0xff]
        %v305 = vld [vmem:[#allocation5 + $0x4e8] sm:$0xff]
        %v306 = vld [vmem:[#allocation5 + $0x4f0] sm:$0xff]
        %v307 = vld [vmem:[#allocation5 + $0x4f8] sm:$0xff]
        %v308 = vld [vmem:[#allocation5 + $0x500] sm:$0xff]
        %v309 = vld [vmem:[#allocation5 + $0x508] sm:$0xff]
        %v310 = vld [vmem:[#allocation5 + $0x510] sm:$0xff]
        %v311 = vld [vmem:[#allocation5 + $0x518] sm:$0xff]
        %v312 = vld [vmem:[#allocation5 + $0x520] sm:$0xff]
        %v313 = vld [vmem:[#allocation5 + $0x528] sm:$0xff]
        %v314 = vld [vmem:[#allocation5 + $0x530] sm:$0xff]
        %v315 = vld [vmem:[#allocation5 + $0x538] sm:$0xff]
        %v316 = vld [vmem:[#allocation5 + $0x540] sm:$0xff]
        %v317 = vld [vmem:[#allocation5 + $0x548] sm:$0xff]
        %v318 = vld [vmem:[#allocation5 + $0x550] sm:$0xff]
        %v319 = vld [vmem:[#allocation5 + $0x558] sm:$0xff]
        %v320 = vld [vmem:[#allocation5 + $0x560] sm:$0xff]
        %v321 = vld [vmem:[#allocation5 + $0x568] sm:$0xff]
        %322 = vmatprep.subr.mxu0 %v225
        %323 = vmatpush1.msra.mxu0 %v224
        %324 = vmatprep.subr.mxu0 %v223
        %325 = vmatpush1.msra.mxu0 %v222
        %326 = vmatprep.subr.mxu0 %v221
        %327 = vmatpush1.msra.mxu0 %v220
        %328 = vmatprep.subr.mxu0 %v219
        %329 = vmatpush1.msra.mxu0 %v218
        %330 = vmatprep.subr.mxu0 %v217
        %331 = vmatpush1.msra.mxu0 %v216
        %332 = vmatprep.subr.mxu0 %v215
        %333 = vmatpush1.msra.mxu0 %v214
        %334 = vmatprep.subr.mxu0 %v213
        %335 = vmatpush1.msra.mxu0 %v212
        %336 = vmatprep.subr.mxu0 %v211
        %337 = vmatpush1.msra.mxu0 %v210
        %338 = vmatprep.subr.mxu0 %v209
        %339 = vmatpush1.msra.mxu0 %v208
        %340 = vmatprep.subr.mxu0 %v207
        %341 = vmatpush1.msra.mxu0 %v206
        %342 = vmatprep.subr.mxu0 %v205
        %343 = vmatpush1.msra.mxu0 %v204
        %344 = vmatprep.subr.mxu0 %v203
        %345 = vmatpush1.msra.mxu0 %v202
        %346 = vmatprep.subr.mxu0 %v201
        %347 = vmatpush1.msra.mxu0 %v200
        %348 = vmatprep.subr.mxu0 %v199
        %349 = vmatpush1.msra.mxu0 %v198
        %350 = vmatprep.subr.mxu0 %v197
        %351 = vmatpush1.msra.mxu0 %v196
        %352 = vmatprep.subr.mxu0 %v195
        %353 = vmatpush1.msra.mxu0 %v194
        %354 = vmatprep.subr.mxu0 0.0
        %355 = vmatpush2.msra.mxu0 0.0
        %356 = vmatprep.subr.mxu0 0.0
        %357 = vmatpush2.msra.mxu0 0.0
        %358 = vmatprep.subr.mxu0 0.0
        %359 = vmatpush2.msra.mxu0 0.0
        %360 = vmatprep.subr.mxu0 0.0
        %361 = vmatpush2.msra.mxu0 0.0
        %362 = vmatprep.subr.mxu0 0.0
        %363 = vmatpush2.msra.mxu0 0.0
        %364 = vmatprep.subr.mxu0 0.0
        %365 = vmatpush2.msra.mxu0 0.0
        %366 = vmatprep.subr.mxu0 0.0
        %367 = vmatpush2.msra.mxu0 0.0
        %368 = vmatprep.subr.mxu0 0.0
        %369 = vmatpush2.msra.mxu0 0.0
        %370 = vmatprep.subr.mxu0 0.0
        %371 = vmatpush2.msra.mxu0 0.0
        %372 = vmatprep.subr.mxu0 0.0
        %373 = vmatpush2.msra.mxu0 0.0
        %374 = vmatprep.subr.mxu0 0.0
        %375 = vmatpush2.msra.mxu0 0.0
        %376 = vmatprep.subr.mxu0 0.0
        %377 = vmatpush2.msra.mxu0 0.0
        %378 = vmatprep.subr.mxu0 0.0
        %379 = vmatpush2.msra.mxu0 0.0
        %380 = vmatprep.subr.mxu0 0.0
        %381 = vmatpush2.msra.mxu0 0.0
        %382 = vmatprep.subr.mxu0 0.0
        %383 = vmatpush2.msra.mxu0 0.0
        %384 = vmatprep.subr.mxu0 0.0
        %385 = vmatpush2.msra.mxu0 0.0
        %386 = vmatprep.mubr.f32.mxu0 0.0
        %387 = vmatmul.mubr.f32.gmra.mxu0 %v179
        %v388 = vpop.f32.mrf.mxu0
        %v389 = vadd.f32 %v182, %v388
        %v390 = vpop.f32.mrf.mxu0
        %v391 = vadd.f32 %v183, %v390
        %392 = vmatprep.mubr.f32.mxu0 0.0
        %393 = vmatmul.mubr.f32.gmra.mxu0 %v180
        %v394 = vpop.f32.mrf.mxu0
        %v395 = vadd.f32 %v184, %v394
        %v396 = vpop.f32.mrf.mxu0
        %v397 = vadd.f32 %v185, %v396
        %398 = vdwg.mxu0
        %v399 = vmul.f32 %v389, %v389
        %v400 = vmul.f32 %v391, %v391
        %v401 = vmul.f32 %v395, %v395
        %v402 = vmul.f32 %v397, %v397
        %403 = vmatprep.subr.mxu0 %v289
        %404 = vmatpush1.msra.mxu0 %v288
        %405 = vmatprep.subr.mxu0 %v287
        %406 = vmatpush1.msra.mxu0 %v286
        %407 = vmatprep.subr.mxu0 %v285
        %408 = vmatpush1.msra.mxu0 %v284
        %409 = vmatprep.subr.mxu0 %v283
        %410 = vmatpush1.msra.mxu0 %v282
        %411 = vmatprep.subr.mxu0 %v281
        %412 = vmatpush1.msra.mxu0 %v280
        %413 = vmatprep.subr.mxu0 %v279
        %414 = vmatpush1.msra.mxu0 %v278
        %415 = vmatprep.subr.mxu0 %v277
        %416 = vmatpush1.msra.mxu0 %v276
        %417 = vmatprep.subr.mxu0 %v275
        %418 = vmatpush1.msra.mxu0 %v274
        %419 = vmatprep.subr.mxu0 %v273
        %420 = vmatpush1.msra.mxu0 %v272
        %421 = vmatprep.subr.mxu0 %v271
        %422 = vmatpush1.msra.mxu0 %v270
        %423 = vmatprep.subr.mxu0 %v269
        %424 = vmatpush1.msra.mxu0 %v268
        %425 = vmatprep.subr.mxu0 %v267
        %426 = vmatpush1.msra.mxu0 %v266
        %427 = vmatprep.subr.mxu0 %v265
        %428 = vmatpush1.msra.mxu0 %v264
        %429 = vmatprep.subr.mxu0 %v263
        %430 = vmatpush1.msra.mxu0 %v262
        %431 = vmatprep.subr.mxu0 %v261
        %432 = vmatpush1.msra.mxu0 %v260
        %433 = vmatprep.subr.mxu0 %v259
        %434 = vmatpush1.msra.mxu0 %v258
        %435 = vmatprep.subr.mxu0 %v321
        %436 = vmatpush2.msra.mxu0 %v320
        %437 = vmatprep.subr.mxu0 %v319
        %438 = vmatpush2.msra.mxu0 %v318
        %439 = vmatprep.subr.mxu0 %v317
        %440 = vmatpush2.msra.mxu0 %v316
        %441 = vmatprep.subr.mxu0 %v315
        %442 = vmatpush2.msra.mxu0 %v314
        %443 = vmatprep.subr.mxu0 %v313
        %444 = vmatpush2.msra.mxu0 %v312
        %445 = vmatprep.subr.mxu0 %v311
        %446 = vmatpush2.msra.mxu0 %v310
        %447 = vmatprep.subr.mxu0 %v309
        %448 = vmatpush2.msra.mxu0 %v308
        %449 = vmatprep.subr.mxu0 %v307
        %450 = vmatpush2.msra.mxu0 %v306
        %451 = vmatprep.subr.mxu0 %v305
        %452 = vmatpush2.msra.mxu0 %v304
        %453 = vmatprep.subr.mxu0 %v303
        %454 = vmatpush2.msra.mxu0 %v302
        %455 = vmatprep.subr.mxu0 %v301
        %456 = vmatpush2.msra.mxu0 %v300
        %457 = vmatprep.subr.mxu0 %v299
        %458 = vmatpush2.msra.mxu0 %v298
        %459 = vmatprep.subr.mxu0 %v297
        %460 = vmatpush2.msra.mxu0 %v296
        %461 = vmatprep.subr.mxu0 %v295
        %462 = vmatpush2.msra.mxu0 %v294
        %463 = vmatprep.subr.mxu0 %v293
        %464 = vmatpush2.msra.mxu0 %v292
        %465 = vmatprep.subr.mxu0 %v291
        %466 = vmatpush2.msra.mxu0 %v290
        %467 = vmatprep.mubr.f32.mxu0 %v391
        %468 = vmatmul.mubr.f32.gmra.mxu0 %v389
        %v469 = vpop.f32.mrf.mxu0
        %v470 = vadd.f32 0.0, %v469
        %v471 = vpop.f32.mrf.mxu0
        %v472 = vadd.f32 0.0, %v471
        %473 = vmatprep.mubr.f32.mxu0 %v397
        %474 = vmatmul.mubr.f32.gmra.mxu0 %v395
        %v475 = vpop.f32.mrf.mxu0
        %v476 = vadd.f32 0.0, %v475
        %v477 = vpop.f32.mrf.mxu0
        %v478 = vadd.f32 0.0, %v477
        %479 = vmatprep.mubr.f32.mxu0 %v400
        %480 = vmatmul.mubr.f32.gmra.mxu0 %v399
        %v481 = vpop.f32.mrf.mxu0
        %v482 = vadd.f32 0.0, %v481
        %v483 = vpop.f32.mrf.mxu0
        %v484 = vadd.f32 0.0, %v483
        %485 = vmatprep.mubr.f32.mxu0 %v402
        %486 = vmatmul.mubr.f32.gmra.mxu0 %v401
        %v487 = vpop.f32.mrf.mxu0
        %v488 = vadd.f32 0.0, %v487
        %v489 = vpop.f32.mrf.mxu0
        %v490 = vadd.f32 0.0, %v489
        %491 = vdwg.mxu0
        %v492 = vmul.f32 %v470, %v470
        %v493 = vmul.f32 %v472, %v472
        %v494 = vmul.f32 %v476, %v476
        %v495 = vmul.f32 %v478, %v478
        %v496 = vsub.f32 %v482, %v492
        %v497 = vsub.f32 %v484, %v493
        %v498 = vsub.f32 %v488, %v494
        %v499 = vsub.f32 %v490, %v495
        %v500 = vmax.f32 %v496, 0.0
        %v501 = vmax.f32 %v497, 0.0
        %v502 = vmax.f32 %v498, 0.0
        %v503 = vmax.f32 %v499, 0.0
        %v504 = vsub.f32 %v389, %v470
        %v505 = vsub.f32 %v391, %v472
        %v506 = vsub.f32 %v395, %v476
        %v507 = vsub.f32 %v397, %v478
        %v508 = vadd.f32 %v500, 1e-05
        %v509 = vadd.f32 %v501, 1e-05
        %v510 = vadd.f32 %v502, 1e-05
        %v511 = vadd.f32 %v503, 1e-05
        %v512 = vrsqrt.pop %v508
        %v513 = vrsqrt.pop %v509
        %v514 = vrsqrt.pop %v510
        %v515 = vrsqrt.pop %v511
        %v516 = vmul.f32 %v504, %v512
        %v517 = vmul.f32 %v505, %v513
        %v518 = vmul.f32 %v506, %v514
        %v519 = vmul.f32 %v507, %v515
        %v520 = vmul.f32 %v516, %v186
        %v521 = vmul.f32 %v517, %v187
        %v522 = vmul.f32 %v518, %v188
        %v523 = vmul.f32 %v519, %v189
        %v524 = vadd.f32 %v520, %v190
        %v525 = vadd.f32 %v521, %v191
        %v526 = vadd.f32 %v522, %v192
        %v527 = vadd.f32 %v523, %v193
        %v528 = vmax.f32 %v524, 0.0
        %v529 = vmax.f32 %v525, 0.0
        %v530 = vmax.f32 %v526, 0.0
        %v531 = vmax.f32 %v527, 0.0
        %532 = vmatprep.subr.mxu0 0.0
        %533 = vmatpush1.msra.mxu0 %v241
        %534 = vmatprep.subr.mxu0 0.0
        %535 = vmatpush1.msra.mxu0 %v240
        %536 = vmatprep.subr.mxu0 0.0
        %537 = vmatpush1.msra.mxu0 %v239
        %538 = vmatprep.subr.mxu0 0.0
        %539 = vmatpush1.msra.mxu0 %v238
        %540 = vmatprep.subr.mxu0 0.0
        %541 = vmatpush1.msra.mxu0 %v237
        %542 = vmatprep.subr.mxu0 0.0
        %543 = vmatpush1.msra.mxu0 %v236
        %544 = vmatprep.subr.mxu0 0.0
        %545 = vmatpush1.msra.mxu0 %v235
        %546 = vmatprep.subr.mxu0 0.0
        %547 = vmatpush1.msra.mxu0 %v234
        %548 = vmatprep.subr.mxu0 0.0
        %549 = vmatpush1.msra.mxu0 %v233
        %550 = vmatprep.subr.mxu0 0.0
        %551 = vmatpush1.msra.mxu0 %v232
        %552 = vmatprep.subr.mxu0 0.0
        %553 = vmatpush1.msra.mxu0 %v231
        %554 = vmatprep.subr.mxu0 0.0
        %555 = vmatpush1.msra.mxu0 %v230
        %556 = vmatprep.subr.mxu0 0.0
        %557 = vmatpush1.msra.mxu0 %v229
        %558 = vmatprep.subr.mxu0 0.0
        %559 = vmatpush1.msra.mxu0 %v228
        %560 = vmatprep.subr.mxu0 0.0
        %561 = vmatpush1.msra.mxu0 %v227
        %562 = vmatprep.subr.mxu0 0.0
        %563 = vmatpush1.msra.mxu0 %v226
        %564 = vmatprep.subr.mxu0 0.0
        %565 = vmatpush2.msra.mxu0 %v257
        %566 = vmatprep.subr.mxu0 0.0
        %567 = vmatpush2.msra.mxu0 %v256
        %568 = vmatprep.subr.mxu0 0.0
        %569 = vmatpush2.msra.mxu0 %v255
        %570 = vmatprep.subr.mxu0 0.0
        %571 = vmatpush2.msra.mxu0 %v254
        %572 = vmatprep.subr.mxu0 0.0
        %573 = vmatpush2.msra.mxu0 %v253
        %574 = vmatprep.subr.mxu0 0.0
        %575 = vmatpush2.msra.mxu0 %v252
        %576 = vmatprep.subr.mxu0 0.0
        %577 = vmatpush2.msra.mxu0 %v251
        %578 = vmatprep.subr.mxu0 0.0
        %579 = vmatpush2.msra.mxu0 %v250
        %580 = vmatprep.subr.mxu0 0.0
        %581 = vmatpush2.msra.mxu0 %v249
        %582 = vmatprep.subr.mxu0 0.0
        %583 = vmatpush2.msra.mxu0 %v248
        %584 = vmatprep.subr.mxu0 0.0
        %585 = vmatpush2.msra.mxu0 %v247
        %586 = vmatprep.subr.mxu0 0.0
        %587 = vmatpush2.msra.mxu0 %v246
        %588 = vmatprep.subr.mxu0 0.0
        %589 = vmatpush2.msra.mxu0 %v245
        %590 = vmatprep.subr.mxu0 0.0
        %591 = vmatpush2.msra.mxu0 %v244
        %592 = vmatprep.subr.mxu0 0.0
        %593 = vmatpush2.msra.mxu0 %v243
        %594 = vmatprep.subr.mxu0 0.0
        %595 = vmatpush2.msra.mxu0 %v242
        %596 = vmatprep.mubr.f32.mxu0 %v529
        %597 = vmatmul.mubr.f32.gmra.mxu0 %v528
        %v598 = vpop.f32.mrf.mxu0
        %v599 = vadd.f32 %v181, %v598
        %v600 = vpop.f32.mrf.mxu0
        %601 = vmatprep.mubr.f32.mxu0 %v531
        %602 = vmatmul.mubr.f32.gmra.mxu0 %v530
        %v603 = vpop.f32.mrf.mxu0
        %v604 = vadd.f32 %v181, %v603
        %v605 = vpop.f32.mrf.mxu0
        %606 = vdwg.mxu0
        %607 = vst [vmem:[%s176] sm:$0xff] %v599
        %608 = vst [vmem:[%s176 + $0x8] sm:$0xff] %v604
        %s609 = sand.u32 %s75, 1
        %s610 = scalar_lea.sflag [#allocation4], %s609
        %s611 = sand.u32 %s75, 1
        %s612 = smul.addr %s611, 16
        %s613 = scalar_lea.vmem [#allocation7], %s612
        // Predicated region
        $region37: #{tpu_custom_call.1} parent=27 // pred_check
          %p614 = pneg %p85
        $region38: #{tpu_custom_call.1} parent=27 // pred_check_branch
          %616 = sbr.rel (%p614) target = $region40
        $region39: #{tpu_custom_call.1} parent=27 // pred_region
          %s617 = smul.u32 2, %s20
          %s619 = ssub.s32 256, 256
          %620 = vsyncadd %s610, %s619
          %s621 = smul.addr %s617, 128
          %s622 = scalar_lea.hbm %s2, %s621
          %s623 = sshll.u32 %s613, 4
          %s624 = int_to_ptr.vmem [resolvable:$true] %s623
          %629 = dma.vmem_to_hbm [thread:$0]  %s624, 256, %s622, %s610, 128, 128, 8
        $region40: #{tpu_custom_call.1} parent=27 // pred_fallthru
          _
      $region28: #{tpu_custom_call.1} parent=5 // pred_fallthru
        _
      %p630 = scmp.le.s32.totalorder 2, %s15
      // Predicated region
      $region41: #{tpu_custom_call.1} parent=5 // pred_check
        %p631 = pneg %p630
      $region42: #{tpu_custom_call.1} parent=5 // pred_check_branch
        %633 = sbr.rel (%p631) target = $region44
      $region43: #{tpu_custom_call.1} parent=5 // pred_region
        %s634 = ssub.s32 %s15, 2
        // Predicated region
        $region45: #{tpu_custom_call.1} parent=43 // pred_check
          %p635 = pneg %p91
        $region46: #{tpu_custom_call.1} parent=43 // pred_check_branch
          %637 = sbr.rel (%p635) target = $region48
        $region47: #{tpu_custom_call.1} parent=43 // pred_region
          %s638 = sand.u32 %s76, 1
          %s639 = scalar_lea.sflag [#allocation4], %s638
          %s640 = sand.u32 %s76, 1
          %s641 = smul.addr %s640, 16
          %s642 = scalar_lea.vmem [#allocation7], %s641
          %643 = dma.done %s639, 256
        $region48: #{tpu_custom_call.1} parent=43 // pred_fallthru
          _
      $region44: #{tpu_custom_call.1} parent=5 // pred_fallthru
        _
    $region6: #{tpu_custom_call.1} parent=1 // loop_footer
      %s19 = sadd.s32 1, %s15
    $region7: #{tpu_custom_call.1} parent=1 // loop_footer_branch
      %14 = sbr.rel target = $region3
    $region8: #{tpu_custom_call.1} parent=1 // loop_exit
      _
    %644 = vsyncpa [#allocation3], 1
    %s645 = scalar_lea.sflag [#allocation3], 1
    %646 = vsyncpa %s645, 1
    %647 = vsyncpa [#allocation6], 1
    %648 = vsyncpa [#allocation4], 1
    %s649 = scalar_lea.sflag [#allocation4], 1
    %650 = vsyncpa %s649, 1

</llo_original>
